<compile_context>
chip_gen: v7x
topology: tpu7x:2x2x1
jax: 0.10.0
libtpu: 0.0.40
codegen_flags: <defaults>
</compile_context>

<pallas_src>
import functools

import jax
import jax.numpy as jnp
from jax.experimental import pallas as pl
from jax.experimental.pallas import tpu as pltpu


def _round_up(x, m):
    return ((x + m - 1) // m) * m


# --------------------------------------------------------------------------
# Kernel 1: streaming max/min partial reduction over a lane-dense [M, W] view.
# --------------------------------------------------------------------------
def _stream_maxmin_kernel(num_blocks, blocks_per_slice, tile_m, m_valid_last,
                          chunk, has_tail,
                          x_ref, maxp_ref, minp_ref, mx_acc, mn_acc):
    p = pl.program_id(0)                      # parallel slice (TensorCore on v7x)
    k = pl.program_id(1)                      # sequential block within the slice
    g = p * blocks_per_slice + k              # global block index

    dtype = x_ref.dtype
    neg = jnp.array(-jnp.inf, dtype)
    pos = jnp.array(jnp.inf, dtype)
    lanes = x_ref.shape[-1]

    # ---- init running accumulators at the start of every slice ------------
    @pl.when(k == 0)
    def _():
        mx_acc[...] = jnp.full(mx_acc.shape, -jnp.inf, dtype)
        mn_acc[...] = jnp.full(mn_acc.shape, jnp.inf, dtype)

    # ---- chunked accumulate (pure VPU max/min into [8, lanes] scratch) ----
    def accum(c, valid_rows=None):
        start = c * chunk
        if not isinstance(start, int):
            start = pl.multiple_of(start, chunk)
        e = x_ref[pl.ds(start, chunk), :]                     # [chunk, lanes]
        if valid_rows is not None:
            row = jax.lax.broadcasted_iota(jnp.int32, (chunk, lanes), 0)
            ok = row < valid_rows
            e_mx = jnp.where(ok, e, neg)
            e_mn = jnp.where(ok, e, pos)
        else:
            e_mx = e
            e_mn = e
        e_mx = e_mx.reshape(chunk // 8, 8, lanes)
        e_mn = e_mn.reshape(chunk // 8, 8, lanes)
        mx_acc[...] = jnp.maximum(mx_acc[...], jnp.max(e_mx, axis=0))
        mn_acc[...] = jnp.minimum(mn_acc[...], jnp.min(e_mn, axis=0))

    n_chunks = tile_m // chunk

    if has_tail:
        # Steady state: unmasked (all blocks except the globally last one).
        @pl.when(g < num_blocks - 1)
        def _():
            @pl.loop(0, n_chunks)
            def _(c):
                accum(c)

        # Last valid block: mask the rows beyond M (sentinels are +/-inf).
        @pl.when(g == num_blocks - 1)
        def _():
            full_chunks = m_valid_last // chunk     # static
            rem = m_valid_last % chunk              # static
            if full_chunks > 0:
                @pl.loop(0, full_chunks)
                def _(c):
                    accum(c)
            if rem > 0:
                accum(full_chunks, valid_rows=rem)
    else:
        # No tail: every in-range block is full (clamped duplicates skipped).
        @pl.when(g < num_blocks)
        def _():
            @pl.loop(0, n_chunks)
            def _(c):
                accum(c)

    # ---- per-slice epilogue: emit the [8, lanes] partials ------------------
    @pl.when(k == blocks_per_slice - 1)
    def _():
        maxp_ref[0] = mx_acc[...]
        minp_ref[0] = mn_acc[...]


def _stream_partial_maxmin(x2, *, per_buffer_bytes, num_parallel):
    """x2: lane-dense [M, lanes] view. Returns (max_part, min_part) of shape
    [P, 8, lanes]; max/min over every candidate row equals the global max/min."""
    m, lanes = x2.shape
    dtype = x2.dtype
    itemsize = dtype.itemsize

    # ~128 KiB (32 vregs) of data per inner-loop step, multiple of 8 rows.
    lane_vregs = -(-lanes // 128)
    chunk = max(8, (256 // lane_vregs) // 8 * 8)

    # Byte-budget block size (multiple of `chunk`), shrunk for tiny inputs.
    budget_rows = max(chunk, (per_buffer_bytes // (lanes * itemsize)) // chunk * chunk)
    tile_m = int(min(budget_rows, _round_up(m, chunk)))

    num_blocks = -(-m // tile_m)
    p_par = max(1, min(num_parallel, num_blocks))
    k_per = -(-num_blocks // p_par)
    m_last = m - (num_blocks - 1) * tile_m
    has_tail = (m % tile_m) != 0

    if p_par * k_per == num_blocks:
        in_map = lambda p, k, _K=k_per: (p * _K + k, 0)
    else:
        # Clamp the (few) overhang grid steps; they are skipped in the kernel.
        in_map = lambda p, k, _K=k_per, _nb=num_blocks: (
            jnp.minimum(p * _K + k, _nb - 1), 0)

    block_bytes = tile_m * lanes * itemsize
    vmem_limit = int(min(48 * 1024 * 1024,
                         max(32 * 1024 * 1024, 2 * block_bytes + 16 * 1024 * 1024)))

    kernel = functools.partial(_stream_maxmin_kernel, num_blocks, k_per, tile_m,
                               m_last, chunk, has_tail)

    max_part, min_part = pl.pallas_call(
        kernel,
        out_shape=(jax.ShapeDtypeStruct((p_par, 8, lanes), dtype),
                   jax.ShapeDtypeStruct((p_par, 8, lanes), dtype)),
        grid_spec=pltpu.PrefetchScalarGridSpec(
            num_scalar_prefetch=0,
            grid=(p_par, k_per),
            in_specs=[pl.BlockSpec((tile_m, lanes), in_map)],
            out_specs=(pl.BlockSpec((1, 8, lanes), lambda p, k: (p, 0, 0)),
                       pl.BlockSpec((1, 8, lanes), lambda p, k: (p, 0, 0))),
            scratch_shapes=[pltpu.VMEM((8, lanes), dtype),
                            pltpu.VMEM((8, lanes), dtype)],
        ),
        compiler_params=pltpu.CompilerParams(
            dimension_semantics=("parallel", "arbitrary"),
            vmem_limit_bytes=vmem_limit,
        ),
    )(x2)
    return max_part, min_part


# --------------------------------------------------------------------------
# Kernel 2: one-shot combine of tiny partials + MLP + sigmoid.
# --------------------------------------------------------------------------
def _combine_mlp_kernel(num_layers, *refs):
    cmax_ref, cmin_ref = refs[0], refs[1]
    param_refs = refs[2:2 + 2 * num_layers]
    pred_ref = refs[2 + 2 * num_layers]
    agg_ref = refs[3 + 2 * num_layers]

    mx = jnp.max(cmax_ref[...], axis=0, keepdims=True)       # [1, D]
    mn = jnp.min(cmin_ref[...], axis=0, keepdims=True)       # [1, D]
    # Subtraction in the input dtype (matches the PyTorch module's dtype flow).
    agg = mx - mn
    agg_ref[...] = agg.astype(agg_ref.dtype)

    h = agg.astype(jnp.float32)
    for i in range(num_layers):
        w = param_refs[2 * i][...].astype(jnp.float32)        # [in, out]
        b = param_refs[2 * i + 1][...].astype(jnp.float32)    # [1, out]
        h = jnp.dot(h, w, preferred_element_type=jnp.float32) + b
        if i != num_layers - 1:
            h = jnp.maximum(h, 0.0)                           # ReLU(inplace=True)
    pred_ref[...] = jax.nn.sigmoid(h).astype(pred_ref.dtype)


# --------------------------------------------------------------------------
# Wrapper: lane-dense view + streaming reduction + combine/MLP.
# --------------------------------------------------------------------------
def maxmin_aggregator_forward(embeddings, weights, biases, *,
                              per_buffer_bytes=8 * 1024 * 1024, num_parallel=2):
    """embeddings: [N, D]; weights[i]: [in_i, out_i] (pre-transposed);
    biases[i]: [out_i]. Returns (pred [out_last], aggregated embedding [D])."""
    n, d = embeddings.shape
    dtype = embeddings.dtype
    num_layers = len(weights)
    out_dim = weights[-1].shape[1]
    biases_2d = [b.reshape(1, -1) for b in biases]

    # Lane-dense fold factor: pack 128//D consecutive rows per 128-lane row.
    fold = 128 // d if (d <= 128 and 128 % d == 0) else 1
    lanes = d * fold
    n_main = (n // fold) * fold
    n_rem = n - n_main

    cand_max_parts = []
    cand_min_parts = []

    if n_main > 0:
        if n_rem == 0:
            x2 = embeddings.reshape(n_main // fold, lanes)    # free metadata reshape
        else:
            # NOTE: when N % (128//D) != 0 XLA may materialize this prefix slice
            # once; align/pad N upstream for very large unaligned inputs.
            x2 = jax.lax.slice(embeddings, (0, 0), (n_main, d)).reshape(
                n_main // fold, lanes)
        max_part, min_part = _stream_partial_maxmin(
            x2, per_buffer_bytes=per_buffer_bytes, num_parallel=num_parallel)
        # [P, 8, lanes] -> [P*8*fold, D] candidate rows (row-major lane groups).
        cand_max_parts.append(max_part.reshape(-1, d))
        cand_min_parts.append(min_part.reshape(-1, d))

    if n_rem > 0:
        # < 128//D leftover rows: tiny, folded in as extra candidates.
        leftover = jax.lax.slice(embeddings, (n_main, 0), (n, d))
        cand_max_parts.append(leftover)
        cand_min_parts.append(leftover)

    cand_max = (jnp.concatenate(cand_max_parts, axis=0)
                if len(cand_max_parts) > 1 else cand_max_parts[0])
    cand_min = (jnp.concatenate(cand_min_parts, axis=0)
                if len(cand_min_parts) > 1 else cand_min_parts[0])

    params = []
    for w, b in zip(weights, biases_2d):
        params.extend([w, b])

    pred, agg = pl.pallas_call(
        functools.partial(_combine_mlp_kernel, num_layers),
        out_shape=(jax.ShapeDtypeStruct((1, out_dim), jnp.float32),
                   jax.ShapeDtypeStruct((1, d), dtype)),
    )(cand_max, cand_min, *params)

    # Match PyTorch output ranks: pred [out_dim], embedding [D].
    return pred[0], agg[0]


# --------------------------------------------------------------------------
# Parameter init (mimics nn.Linear default) and pure-JAX reference.
# --------------------------------------------------------------------------
def init_params(key, layer_sizes):
    weights, biases = [], []
    for i in range(len(layer_sizes) - 1):
        fan_in, fan_out = layer_sizes[i], layer_sizes[i + 1]
        key, kw, kb = jax.random.split(key, 3)
        bound = 1.0 / (fan_in ** 0.5)
        # Stored already transposed: [in, out]  (x @ W == PyTorch x @ W.T)
        w = jax.random.uniform(kw, (fan_in, fan_out), jnp.float32, -bound, bound)
        b = jax.random.uniform(kb, (fan_out,), jnp.float32, -bound, bound)
        weights.append(w)
        biases.append(b)
    return key, weights, biases


def _reference(embeddings, weights, biases):
    agg = jnp.max(embeddings, axis=0) - jnp.min(embeddings, axis=0)
    h = agg
    for i, (w, b) in enumerate(zip(weights, biases)):
        h = h @ w + b
        if i != len(weights) - 1:
            h = jnp.maximum(h, 0.0)
    return jax.nn.sigmoid(h), agg


if __name__ == "__main__":
    key = jax.random.PRNGKey(0)

    def run_case(key, n, d, layer_sizes, **kw):
        key, k_emb = jax.random.split(key)
        emb = jax.random.normal(k_emb, (n, d), jnp.float32)
        key, weights, biases = init_params(key, layer_sizes)
        ref_pred, ref_agg = _reference(emb, weights, biases)
        pred, agg = maxmin_aggregator_forward(emb, weights, biases, **kw)
        jax.block_until_ready((pred, agg))
        assert agg.shape == ref_agg.shape and pred.shape == ref_pred.shape
        assert jnp.allclose(agg, ref_agg, atol=1e-5), ("agg mismatch", n, d, kw)
        assert jnp.allclose(pred, ref_pred, atol=1e-5), ("pred mismatch", n, d, kw)
        return key

    # A) tiny, N not a multiple of 128//D -> leftover rows + masked single block.
    key = run_case(key, 37, 32, [32, 64, 1])
    # B) multi-block stream, 2-way parallel slices, no tail mask in steady state.
    key = run_case(key, 8192, 32, [32, 64, 1], per_buffer_bytes=128 * 1024)
    # C) odd block count (clamped overhang grid step) + masked last block.
    key = run_case(key, 2500, 32, [32, 64, 1], per_buffer_bytes=128 * 1024)
    # D) D that does not divide 128 -> lane-sparse fallback path.
    key = run_case(key, 100, 48, [48, 64, 1])
    # E) default byte-budget tiling, N a clean multiple of 128//D.
    key = run_case(key, 64, 32, [32, 64, 1])

    print("KERNEL_OK")
</pallas_src>

<mosaic_0001>
module attributes {stable_mosaic.version = 11 : i64} {
  func.func @_stream_maxmin_kernel(%arg0: i32, %arg1: i32, %arg2: memref<256x128xf32, #tpu.memory_space<vmem>>, %arg3: memref<1x8x128xf32, #tpu.memory_space<vmem>>, %arg4: memref<1x8x128xf32, #tpu.memory_space<vmem>>, %arg5: memref<8x128xf32, #tpu.memory_space<vmem>>, %arg6: memref<8x128xf32, #tpu.memory_space<vmem>>) attributes {dimension_semantics = [#tpu.dimension_semantics<parallel>, #tpu.dimension_semantics<arbitrary>], iteration_bounds = array<i64: 1, 1>, scalar_prefetch = 0 : i64, scratch_operands = 2 : i64, tpu.core_type = #tpu.core_type<tc>, window_params = [{transform_indices = @transform_0, window_bounds = array<i64: 256, 128>}, {transform_indices = @transform_1, window_bounds = array<i64: 1, 8, 128>}, {transform_indices = @transform_2, window_bounds = array<i64: 1, 8, 128>}]} {
    %c1_i32 = arith.constant 1 : i32
    %0 = arith.muli %arg0, %c1_i32 : i32
    %1 = arith.addi %0, %arg1 : i32
    %c0_i32 = arith.constant 0 : i32
    %2 = arith.cmpi eq, %arg1, %c0_i32 : i32
    %3 = arith.extui %2 : i1 to i32
    %c0_i32_0 = arith.constant 0 : i32
    %4 = arith.cmpi ne, %3, %c0_i32_0 : i32
    scf.if %4 {
      %cst_8 = arith.constant 0xFF800000 : f32
      %14 = vector.broadcast %cst_8 : f32 to vector<8x128xf32>
      %c0 = arith.constant 0 : index
      %c0_9 = arith.constant 0 : index
      %15 = vector.load %arg5[%c0, %c0_9] : memref<8x128xf32, #tpu.memory_space<vmem>>, vector<8x128xf32>
      tpu.vector_store %arg5[%c0, %c0_9], %14 {strides = array<i32>} : memref<8x128xf32, #tpu.memory_space<vmem>>, vector<8x128xf32>,
      %cst_10 = arith.constant 0x7F800000 : f32
      %16 = vector.broadcast %cst_10 : f32 to vector<8x128xf32>
      %c0_11 = arith.constant 0 : index
      %c0_12 = arith.constant 0 : index
      %17 = vector.load %arg6[%c0_11, %c0_12] : memref<8x128xf32, #tpu.memory_space<vmem>>, vector<8x128xf32>
      tpu.vector_store %arg6[%c0_11, %c0_12], %16 {strides = array<i32>} : memref<8x128xf32, #tpu.memory_space<vmem>>, vector<8x128xf32>,
    } else {
    }
    %c0_i32_1 = arith.constant 0 : i32
    %5 = arith.cmpi slt, %1, %c0_i32_1 : i32
    %6 = arith.extui %5 : i1 to i32
    %c0_i32_2 = arith.constant 0 : i32
    %7 = arith.cmpi ne, %6, %c0_i32_2 : i32
    scf.if %7 {
      %c0_i32_8 = arith.constant 0 : i32
      %c1_i32_9 = arith.constant 1 : i32
      %14 = arith.muli %c0_i32_8, %c1_i32_9 : i32
      %c0_i32_10 = arith.constant 0 : i32
      %15 = arith.addi %c0_i32_10, %14 : i32
      %c256_i32 = arith.constant 256 : i32
      %16 = arith.muli %15, %c256_i32 : i32
      %17 = tpu.assume_multiple %16, 256 : i32
      %18 = arith.index_cast %17 : i32 to index
      %c0 = arith.constant 0 : index
      %19 = vector.load %arg2[%18, %c0] : memref<256x128xf32, #tpu.memory_space<vmem>>, vector<256x128xf32>
      %20 = vector.shape_cast %19 : vector<256x128xf32> to vector<32x8x128xf32>
      %21 = vector.shape_cast %19 : vector<256x128xf32> to vector<32x8x128xf32>
      %c0_11 = arith.constant 0 : index
      %c0_12 = arith.constant 0 : index
      %22 = vector.load %arg5[%c0_11, %c0_12] : memref<8x128xf32, #tpu.memory_space<vmem>>, vector<8x128xf32>
      %cst_13 = arith.constant dense<0xFF800000> : vector<8x128xf32>
      %23 = vector.multi_reduction <maximumf>, %20, %cst_13 [0] : vector<32x8x128xf32> to vector<8x128xf32>
      %24 = arith.maximumf %22, %23 : vector<8x128xf32>
      %c0_14 = arith.constant 0 : index
      %c0_15 = arith.constant 0 : index
      %25 = vector.load %arg5[%c0_14, %c0_15] : memref<8x128xf32, #tpu.memory_space<vmem>>, vector<8x128xf32>
      tpu.vector_store %arg5[%c0_14, %c0_15], %24 {strides = array<i32>} : memref<8x128xf32, #tpu.memory_space<vmem>>, vector<8x128xf32>,
      %c0_16 = arith.constant 0 : index
      %c0_17 = arith.constant 0 : index
      %26 = vector.load %arg6[%c0_16, %c0_17] : memref<8x128xf32, #tpu.memory_space<vmem>>, vector<8x128xf32>
      %cst_18 = arith.constant dense<0x7F800000> : vector<8x128xf32>
      %27 = vector.multi_reduction <minimumf>, %21, %cst_18 [0] : vector<32x8x128xf32> to vector<8x128xf32>
      %28 = arith.minimumf %26, %27 : vector<8x128xf32>
      %c0_19 = arith.constant 0 : index
      %c0_20 = arith.constant 0 : index
      %29 = vector.load %arg6[%c0_19, %c0_20] : memref<8x128xf32, #tpu.memory_space<vmem>>, vector<8x128xf32>
      tpu.vector_store %arg6[%c0_19, %c0_20], %28 {strides = array<i32>} : memref<8x128xf32, #tpu.memory_space<vmem>>, vector<8x128xf32>,
      %c1_i32_21 = arith.constant 1 : i32
    } else {
    }
    %c0_i32_3 = arith.constant 0 : i32
    %8 = arith.cmpi eq, %1, %c0_i32_3 : i32
    %9 = arith.extui %8 : i1 to i32
    %cst = arith.constant 0xFF800000 : f32
    %cst_4 = arith.constant 0x7F800000 : f32
    %c0_i32_5 = arith.constant 0 : i32
    %10 = arith.cmpi ne, %9, %c0_i32_5 : i32
    scf.if %10 {
      %c0 = arith.constant 0 : index
      %c0_8 = arith.constant 0 : index
      %14 = vector.load %arg2[%c0, %c0_8] : memref<256x128xf32, #tpu.memory_space<vmem>>, vector<256x128xf32>
      %15 = tpu.iota {dimensions = array<i32: 0>} : vector<256x128xi32>
      %c9_i32 = arith.constant 9 : i32
      %16 = vector.broadcast %c9_i32 : i32 to vector<256x128xi32>
      %17 = arith.cmpi slt, %15, %16 : vector<256x128xi32>
      %18 = vector.broadcast %cst : f32 to vector<256x128xf32>
      %19 = arith.select %17, %14, %18 : vector<256x128xi1>, vector<256x128xf32>
      %20 = vector.broadcast %cst_4 : f32 to vector<256x128xf32>
      %21 = arith.select %17, %14, %20 : vector<256x128xi1>, vector<256x128xf32>
      %22 = vector.shape_cast %19 : vector<256x128xf32> to vector<32x8x128xf32>
      %23 = vector.shape_cast %21 : vector<256x128xf32> to vector<32x8x128xf32>
      %c0_9 = arith.constant 0 : index
      %c0_10 = arith.constant 0 : index
      %24 = vector.load %arg5[%c0_9, %c0_10] : memref<8x128xf32, #tpu.memory_space<vmem>>, vector<8x128xf32>
      %cst_11 = arith.constant dense<0xFF800000> : vector<8x128xf32>
      %25 = vector.multi_reduction <maximumf>, %22, %cst_11 [0] : vector<32x8x128xf32> to vector<8x128xf32>
      %26 = arith.maximumf %24, %25 : vector<8x128xf32>
      %c0_12 = arith.constant 0 : index
      %c0_13 = arith.constant 0 : index
      %27 = vector.load %arg5[%c0_12, %c0_13] : memref<8x128xf32, #tpu.memory_space<vmem>>, vector<8x128xf32>
      tpu.vector_store %arg5[%c0_12, %c0_13], %26 {strides = array<i32>} : memref<8x128xf32, #tpu.memory_space<vmem>>, vector<8x128xf32>,
      %c0_14 = arith.constant 0 : index
      %c0_15 = arith.constant 0 : index
      %28 = vector.load %arg6[%c0_14, %c0_15] : memref<8x128xf32, #tpu.memory_space<vmem>>, vector<8x128xf32>
      %cst_16 = arith.constant dense<0x7F800000> : vector<8x128xf32>
      %29 = vector.multi_reduction <minimumf>, %23, %cst_16 [0] : vector<32x8x128xf32> to vector<8x128xf32>
      %30 = arith.minimumf %28, %29 : vector<8x128xf32>
      %c0_17 = arith.constant 0 : index
      %c0_18 = arith.constant 0 : index
      %31 = vector.load %arg6[%c0_17, %c0_18] : memref<8x128xf32, #tpu.memory_space<vmem>>, vector<8x128xf32>
      tpu.vector_store %arg6[%c0_17, %c0_18], %30 {strides = array<i32>} : memref<8x128xf32, #tpu.memory_space<vmem>>, vector<8x128xf32>,
    } else {
    }
    %c0_i32_6 = arith.constant 0 : i32
    %11 = arith.cmpi eq, %arg1, %c0_i32_6 : i32
    %12 = arith.extui %11 : i1 to i32
    %c0_i32_7 = arith.constant 0 : i32
    %13 = arith.cmpi ne, %12, %c0_i32_7 : i32
    scf.if %13 {
      %c0 = arith.constant 0 : index
      %c0_8 = arith.constant 0 : index
      %14 = vector.load %arg5[%c0, %c0_8] : memref<8x128xf32, #tpu.memory_space<vmem>>, vector<8x128xf32>
      %c0_9 = arith.constant 0 : index
      %c0_10 = arith.constant 0 : index
      %c0_11 = arith.constant 0 : index
      %15 = vector.load %arg3[%c0_9, %c0_10, %c0_11] : memref<1x8x128xf32, #tpu.memory_space<vmem>>, vector<1x8x128xf32>
      %16 = vector.shape_cast %15 : vector<1x8x128xf32> to vector<8x128xf32>
      %17 = vector.shape_cast %14 : vector<8x128xf32> to vector<1x8x128xf32>
      tpu.vector_store %arg3[%c0_9, %c0_10, %c0_11], %17 {strides = array<i32>} : memref<1x8x128xf32, #tpu.memory_space<vmem>>, vector<1x8x128xf32>,
      %c0_12 = arith.constant 0 : index
      %c0_13 = arith.constant 0 : index
      %18 = vector.load %arg6[%c0_12, %c0_13] : memref<8x128xf32, #tpu.memory_space<vmem>>, vector<8x128xf32>
      %c0_14 = arith.constant 0 : index
      %c0_15 = arith.constant 0 : index
      %c0_16 = arith.constant 0 : index
      %19 = vector.load %arg4[%c0_14, %c0_15, %c0_16] : memref<1x8x128xf32, #tpu.memory_space<vmem>>, vector<1x8x128xf32>
      %20 = vector.shape_cast %19 : vector<1x8x128xf32> to vector<8x128xf32>
      %21 = vector.shape_cast %18 : vector<8x128xf32> to vector<1x8x128xf32>
      tpu.vector_store %arg4[%c0_14, %c0_15, %c0_16], %21 {strides = array<i32>} : memref<1x8x128xf32, #tpu.memory_space<vmem>>, vector<1x8x128xf32>,
    } else {
    }
    return
  }
  func.func @transform_0(%arg0: i32, %arg1: i32) -> (i32, i32) {
    %c1_i32 = arith.constant 1 : i32
    %0 = arith.muli %arg0, %c1_i32 : i32
    %1 = arith.addi %0, %arg1 : i32
    %c0_i32 = arith.constant 0 : i32
    %c0_i32_0 = arith.constant 0 : i32
    return %1, %c0_i32 : i32, i32
  }
  func.func @transform_1(%arg0: i32, %arg1: i32) -> (i32, i32, i32) {
    %c0_i32 = arith.constant 0 : i32
    %c0_i32_0 = arith.constant 0 : i32
    %c0_i32_1 = arith.constant 0 : i32
    return %arg0, %c0_i32, %c0_i32_0 : i32, i32, i32
  }
  func.func @transform_2(%arg0: i32, %arg1: i32) -> (i32, i32, i32) {
    %c0_i32 = arith.constant 0 : i32
    %c0_i32_0 = arith.constant 0 : i32
    %c0_i32_1 = arith.constant 0 : i32
    return %arg0, %c0_i32, %c0_i32_0 : i32, i32, i32
  }
}

</mosaic_0001>

<llo_original>
// kernel: tpu_custom_call.1
$region0: #{tpu_custom_call.1}
  #allocation0 [shape = 'u32[]', space=smem, size = 0x4, offset = 0x4, fixed_abs, tag = 'smem constant byte address 0x4 - core index']
  #allocation1 [shape = 'u32[144,128]{1,0:T(1,128)}', space=vmem, size = 0x12000, scoped, tag = 'internal scratch']
  #allocation2 [shape = 'f32[8,128]{1,0:T(8,128)}', space=vmem, size = 0x1000, scoped, tag = 'scratch operand']
  #allocation3 [shape = 'f32[8,128]{1,0:T(8,128)}', space=vmem, size = 0x1000, scoped, tag = 'scratch operand']
  %s0 = inlined_call_operand.hbm [shape: f32[9,128], index: 0, kind: input, shape index: {}]
  %s1 = inlined_call_operand.hbm [shape: f32[1,8,128], index: 1, kind: output, shape index: {0}]
  %s2 = inlined_call_operand.hbm [shape: f32[1,8,128], index: 2, kind: output, shape index: {1}]
  %3 = xla_tuple %s1, %s2
  %s4 = sld [smem:[#allocation0]]
  $region42: #{tpu_custom_call.1} parent=0
    _
  %s6 = ssub.s32 1, %s4
  %s7 = scalar_select 0, %s6, %s4
  $region1: #{tpu_custom_call.1} parent=0
    #allocation4 [shape = 'u8[131072]{0}', space=vmem, size = 0x20000, scoped, tag = 'input window, operand 0, single buffered']
    #allocation5 [shape = 's32[1]{0}', space=sflag, size = 0x4, scoped, tag = 'scoped memory for tpu_custom_call.1']
    #allocation6 [shape = 's32[1]{0}', space=sflag, size = 0x4, scoped, tag = 'scoped memory for tpu_custom_call.1']
    #allocation7 [shape = 'u8[4096]{0}', space=vmem, size = 0x1000, scoped, tag = 'output window, operand 0, single buffered']
    #allocation8 [shape = 'u8[4096]{0}', space=vmem, size = 0x1000, scoped, tag = 'output window, operand 1, single buffered']
    #allocation9 [shape = 's32[1]{0}', space=sflag, size = 0x4, scoped, tag = 'scoped memory for tpu_custom_call.1']
    %8 = vsyncpa [#allocation5], 0
    %9 = vsyncpa [#allocation6], 0
    %10 = vsyncpa [#allocation9], 0
    // Predicated region
    $region2: #{tpu_custom_call.1} parent=1 // pred_check
      _
    $region3: #{tpu_custom_call.1} parent=1 // pred_check_branch
      %12 = sbr.rel (0) target = $region5
    $region4: #{tpu_custom_call.1} parent=1 // pred_region
      %s13 = sadd.s32 0, 0
      %s14 = smul.u32 32, %s13
      %s15 = ssub.s32 2, %s14
      %s16 = smul.u32 128, %s15
      %s18 = ssub.s32 4096, %s16
      %19 = vsyncadd [#allocation5], %s18
      %p20 = scmp.ne.s32.totalorder 0, %s16
      %s21 = smul.addr %s14, 128
      %s22 = scalar_lea.hbm %s0, %s21
      %s23 = smul.u32 8, %s15
      %s24 = sshll.u32 [#allocation4], 4
      %s25 = int_to_ptr.vmem [resolvable:$true] %s24
      %s26 = sshll.u32 %s23, 4
      %30 = dma.hbm_to_vmem [thread:$0]  (%p20), %s22, %s26, %s25, [#allocation5], 128, 128, 8
    $region5: #{tpu_custom_call.1} parent=1 // pred_fallthru
      _
    // Predicated region
    $region6: #{tpu_custom_call.1} parent=1 // pred_check
      _
    $region7: #{tpu_custom_call.1} parent=1 // pred_check_branch
      %32 = sbr.rel (0) target = $region9
    $region8: #{tpu_custom_call.1} parent=1 // pred_region
      %33 = dma.done [#allocation5], 4096
    $region9: #{tpu_custom_call.1} parent=1 // pred_fallthru
      _
    %s34 = sadd.s32 0, 0
    %s35 = smul.u32 32, %s34
    %s36 = ssub.s32 2, %s35
    %s37 = smul.u32 128, %s36
    %s38 = sadd.s32 0, 0
    %p39 = scmp.eq.s32.totalorder 0, 0
    // Predicated region
    $region10: #{tpu_custom_call.1} parent=1 // pred_check
      %p40 = pneg %p39
    $region11: #{tpu_custom_call.1} parent=1 // pred_check_branch
      %42 = sbr.rel (%p40) target = $region13
    $region12: #{tpu_custom_call.1} parent=1 // pred_region
      %43 = vst [vmem:[#allocation2] sm:$0xff] -inf
      %44 = vst [vmem:[#allocation3] sm:$0xff] inf
    $region13: #{tpu_custom_call.1} parent=1 // pred_fallthru
      _
    %p45 = scmp.lt.s32.totalorder %s38, 0
    // Predicated region
    $region14: #{tpu_custom_call.1} parent=1 // pred_check
      %p46 = pneg %p45
    $region15: #{tpu_custom_call.1} parent=1 // pred_check_branch
      %48 = sbr.rel (%p46) target = $region17
    $region16: #{tpu_custom_call.1} parent=1 // pred_region
      %v49 = vld [vmem:[#allocation4] sm:$0xff]
      %v50 = vld [vmem:[#allocation4 + $0x8] sm:$0xff]
      %v51 = vld [vmem:[#allocation4 + $0x10] sm:$0xff]
      %v52 = vld [vmem:[#allocation4 + $0x18] sm:$0xff]
      %v53 = vld [vmem:[#allocation4 + $0x20] sm:$0xff]
      %v54 = vld [vmem:[#allocation4 + $0x28] sm:$0xff]
      %v55 = vld [vmem:[#allocation4 + $0x30] sm:$0xff]
      %v56 = vld [vmem:[#allocation4 + $0x38] sm:$0xff]
      %v57 = vld [vmem:[#allocation4 + $0x40] sm:$0xff]
      %v58 = vld [vmem:[#allocation4 + $0x48] sm:$0xff]
      %v59 = vld [vmem:[#allocation4 + $0x50] sm:$0xff]
      %v60 = vld [vmem:[#allocation4 + $0x58] sm:$0xff]
      %v61 = vld [vmem:[#allocation4 + $0x60] sm:$0xff]
      %v62 = vld [vmem:[#allocation4 + $0x68] sm:$0xff]
      %v63 = vld [vmem:[#allocation4 + $0x70] sm:$0xff]
      %v64 = vld [vmem:[#allocation4 + $0x78] sm:$0xff]
      %v65 = vld [vmem:[#allocation4 + $0x80] sm:$0xff]
      %v66 = vld [vmem:[#allocation4 + $0x88] sm:$0xff]
      %v67 = vld [vmem:[#allocation4 + $0x90] sm:$0xff]
      %v68 = vld [vmem:[#allocation4 + $0x98] sm:$0xff]
      %v69 = vld [vmem:[#allocation4 + $0xa0] sm:$0xff]
      %v70 = vld [vmem:[#allocation4 + $0xa8] sm:$0xff]
      %v71 = vld [vmem:[#allocation4 + $0xb0] sm:$0xff]
      %v72 = vld [vmem:[#allocation4 + $0xb8] sm:$0xff]
      %v73 = vld [vmem:[#allocation4 + $0xc0] sm:$0xff]
      %v74 = vld [vmem:[#allocation4 + $0xc8] sm:$0xff]
      %v75 = vld [vmem:[#allocation4 + $0xd0] sm:$0xff]
      %v76 = vld [vmem:[#allocation4 + $0xd8] sm:$0xff]
      %v77 = vld [vmem:[#allocation4 + $0xe0] sm:$0xff]
      %v78 = vld [vmem:[#allocation4 + $0xe8] sm:$0xff]
      %v79 = vld [vmem:[#allocation4 + $0xf0] sm:$0xff]
      %v80 = vld [vmem:[#allocation4 + $0xf8] sm:$0xff]
      %v81 = vld [vmem:[#allocation2] sm:$0xff]
      %v82 = vmax.f32 %v49, %v53
      %v83 = vmax.f32 %v50, %v54
      %v84 = vmax.f32 %v51, %v55
      %v85 = vmax.f32 %v52, %v56
      %v86 = vmax.f32 %v82, %v57
      %v87 = vmax.f32 %v83, %v58
      %v88 = vmax.f32 %v84, %v59
      %v89 = vmax.f32 %v85, %v60
      %v90 = vmax.f32 %v86, %v61
      %v91 = vmax.f32 %v87, %v62
      %v92 = vmax.f32 %v88, %v63
      %v93 = vmax.f32 %v89, %v64
      %v94 = vmax.f32 %v90, %v65
      %v95 = vmax.f32 %v91, %v66
      %v96 = vmax.f32 %v92, %v67
      %v97 = vmax.f32 %v93, %v68
      %v98 = vmax.f32 %v94, %v69
      %v99 = vmax.f32 %v95, %v70
      %v100 = vmax.f32 %v96, %v71
      %v101 = vmax.f32 %v97, %v72
      %v102 = vmax.f32 %v98, %v73
      %v103 = vmax.f32 %v99, %v74
      %v104 = vmax.f32 %v100, %v75
      %v105 = vmax.f32 %v101, %v76
      %v106 = vmax.f32 %v102, %v77
      %v107 = vmax.f32 %v103, %v78
      %v108 = vmax.f32 %v104, %v79
      %v109 = vmax.f32 %v105, %v80
      %v110 = vmax.f32 %v106, %v107
      %v111 = vmax.f32 %v108, %v109
      %v112 = vmax.f32 %v110, %v111
      %v113 = vmax.f32 %v81, %v112
      %114 = vst [vmem:[#allocation2] sm:$0xff] %v113
      %v115 = vld [vmem:[#allocation3] sm:$0xff]
      %v116 = vmin.f32 %v49, %v53
      %v117 = vmin.f32 %v50, %v54
      %v118 = vmin.f32 %v51, %v55
      %v119 = vmin.f32 %v52, %v56
      %v120 = vmin.f32 %v116, %v57
      %v121 = vmin.f32 %v117, %v58
      %v122 = vmin.f32 %v118, %v59
      %v123 = vmin.f32 %v119, %v60
      %v124 = vmin.f32 %v120, %v61
      %v125 = vmin.f32 %v121, %v62
      %v126 = vmin.f32 %v122, %v63
      %v127 = vmin.f32 %v123, %v64
      %v128 = vmin.f32 %v124, %v65
      %v129 = vmin.f32 %v125, %v66
      %v130 = vmin.f32 %v126, %v67
      %v131 = vmin.f32 %v127, %v68
      %v132 = vmin.f32 %v128, %v69
      %v133 = vmin.f32 %v129, %v70
      %v134 = vmin.f32 %v130, %v71
      %v135 = vmin.f32 %v131, %v72
      %v136 = vmin.f32 %v132, %v73
      %v137 = vmin.f32 %v133, %v74
      %v138 = vmin.f32 %v134, %v75
      %v139 = vmin.f32 %v135, %v76
      %v140 = vmin.f32 %v136, %v77
      %v141 = vmin.f32 %v137, %v78
      %v142 = vmin.f32 %v138, %v79
      %v143 = vmin.f32 %v139, %v80
      %v144 = vmin.f32 %v140, %v141
      %v145 = vmin.f32 %v142, %v143
      %v146 = vmin.f32 %v144, %v145
      %v147 = vmin.f32 %v115, %v146
      %148 = vst [vmem:[#allocation3] sm:$0xff] %v147
    $region17: #{tpu_custom_call.1} parent=1 // pred_fallthru
      _
    %p149 = scmp.eq.s32.totalorder %s38, 0
    // Predicated region
    $region18: #{tpu_custom_call.1} parent=1 // pred_check
      %p150 = pneg %p149
    $region19: #{tpu_custom_call.1} parent=1 // pred_check_branch
      %152 = sbr.rel (%p150) target = $region21
    $region20: #{tpu_custom_call.1} parent=1 // pred_region
      %v153 = vld [vmem:[#allocation4] sm:$0xff]
      %v154 = vld [vmem:[#allocation4 + $0x8] sm:$0xff]
      %v155 = vld [vmem:[#allocation4 + $0x10] sm:$0xff]
      %v156 = vld [vmem:[#allocation4 + $0x18] sm:$0xff]
      %v157 = vld [vmem:[#allocation4 + $0x20] sm:$0xff]
      %v158 = vld [vmem:[#allocation4 + $0x28] sm:$0xff]
      %v159 = vld [vmem:[#allocation4 + $0x30] sm:$0xff]
      %v160 = vld [vmem:[#allocation4 + $0x38] sm:$0xff]
      %v161 = vld [vmem:[#allocation4 + $0x40] sm:$0xff]
      %v162 = vld [vmem:[#allocation4 + $0x48] sm:$0xff]
      %v163 = vld [vmem:[#allocation4 + $0x50] sm:$0xff]
      %v164 = vld [vmem:[#allocation4 + $0x58] sm:$0xff]
      %v165 = vld [vmem:[#allocation4 + $0x60] sm:$0xff]
      %v166 = vld [vmem:[#allocation4 + $0x68] sm:$0xff]
      %v167 = vld [vmem:[#allocation4 + $0x70] sm:$0xff]
      %v168 = vld [vmem:[#allocation4 + $0x78] sm:$0xff]
      %v169 = vld [vmem:[#allocation4 + $0x80] sm:$0xff]
      %v170 = vld [vmem:[#allocation4 + $0x88] sm:$0xff]
      %v171 = vld [vmem:[#allocation4 + $0x90] sm:$0xff]
      %v172 = vld [vmem:[#allocation4 + $0x98] sm:$0xff]
      %v173 = vld [vmem:[#allocation4 + $0xa0] sm:$0xff]
      %v174 = vld [vmem:[#allocation4 + $0xa8] sm:$0xff]
      %v175 = vld [vmem:[#allocation4 + $0xb0] sm:$0xff]
      %v176 = vld [vmem:[#allocation4 + $0xb8] sm:$0xff]
      %v177 = vld [vmem:[#allocation4 + $0xc0] sm:$0xff]
      %v178 = vld [vmem:[#allocation4 + $0xc8] sm:$0xff]
      %v179 = vld [vmem:[#allocation4 + $0xd0] sm:$0xff]
      %v180 = vld [vmem:[#allocation4 + $0xd8] sm:$0xff]
      %v181 = vld [vmem:[#allocation4 + $0xe0] sm:$0xff]
      %v182 = vld [vmem:[#allocation4 + $0xe8] sm:$0xff]
      %v183 = vld [vmem:[#allocation4 + $0xf0] sm:$0xff]
      %v184 = vld [vmem:[#allocation4 + $0xf8] sm:$0xff]
      %v185 = vlaneseq
      %v186 = vshrl.u32 %v185, 7
      %v187 = vadd.s32 %v186, 8
      %v188 = vadd.s32 %v186, 16
      %v189 = vadd.s32 %v186, 24
      %v190 = vadd.s32 %v186, 32
      %v191 = vadd.s32 %v186, 40
      %v192 = vadd.s32 %v186, 48
      %v193 = vadd.s32 %v186, 56
      %v194 = vadd.s32 %v186, 64
      %v195 = vadd.s32 %v186, 72
      %v196 = vadd.s32 %v186, 80
      %v197 = vadd.s32 %v186, 88
      %v198 = vadd.s32 %v186, 96
      %v199 = vadd.s32 %v186, 104
      %v200 = vadd.s32 %v186, 112
      %v201 = vadd.s32 %v186, 120
      %v202 = vadd.s32 %v186, 128
      %v203 = vadd.s32 %v186, 136
      %v204 = vadd.s32 %v186, 144
      %v205 = vadd.s32 %v186, 152
      %v206 = vadd.s32 %v186, 160
      %v207 = vadd.s32 %v186, 168
      %v208 = vadd.s32 %v186, 176
      %v209 = vadd.s32 %v186, 184
      %v210 = vadd.s32 %v186, 192
      %v211 = vadd.s32 %v186, 200
      %v212 = vadd.s32 %v186, 208
      %v213 = vadd.s32 %v186, 216
      %v214 = vadd.s32 %v186, 224
      %v215 = vadd.s32 %v186, 232
      %v216 = vadd.s32 %v186, 240
      %v217 = vadd.s32 %v186, 248
      %vm218 = vcmp.lt.s32.totalorder %v186, 9
      %vm219 = vcmp.lt.s32.totalorder %v187, 9
      %vm220 = vcmp.lt.s32.totalorder %v188, 9
      %vm221 = vcmp.lt.s32.totalorder %v189, 9
      %vm222 = vcmp.lt.s32.totalorder %v190, 9
      %vm223 = vcmp.lt.s32.totalorder %v191, 9
      %vm224 = vcmp.lt.s32.totalorder %v192, 9
      %vm225 = vcmp.lt.s32.totalorder %v193, 9
      %vm226 = vcmp.lt.s32.totalorder %v194, 9
      %vm227 = vcmp.lt.s32.totalorder %v195, 9
      %vm228 = vcmp.lt.s32.totalorder %v196, 9
      %vm229 = vcmp.lt.s32.totalorder %v197, 9
      %vm230 = vcmp.lt.s32.totalorder %v198, 9
      %vm231 = vcmp.lt.s32.totalorder %v199, 9
      %vm232 = vcmp.lt.s32.totalorder %v200, 9
      %vm233 = vcmp.lt.s32.totalorder %v201, 9
      %vm234 = vcmp.lt.s32.totalorder %v202, 9
      %vm235 = vcmp.lt.s32.totalorder %v203, 9
      %vm236 = vcmp.lt.s32.totalorder %v204, 9
      %vm237 = vcmp.lt.s32.totalorder %v205, 9
      %vm238 = vcmp.lt.s32.totalorder %v206, 9
      %vm239 = vcmp.lt.s32.totalorder %v207, 9
      %vm240 = vcmp.lt.s32.totalorder %v208, 9
      %vm241 = vcmp.lt.s32.totalorder %v209, 9
      %vm242 = vcmp.lt.s32.totalorder %v210, 9
      %vm243 = vcmp.lt.s32.totalorder %v211, 9
      %vm244 = vcmp.lt.s32.totalorder %v212, 9
      %vm245 = vcmp.lt.s32.totalorder %v213, 9
      %vm246 = vcmp.lt.s32.totalorder %v214, 9
      %vm247 = vcmp.lt.s32.totalorder %v215, 9
      %vm248 = vcmp.lt.s32.totalorder %v216, 9
      %vm249 = vcmp.lt.s32.totalorder %v217, 9
      %v250 = vsel %vm218, %v153, -inf
      %v251 = vsel %vm219, %v154, -inf
      %v252 = vsel %vm220, %v155, -inf
      %v253 = vsel %vm221, %v156, -inf
      %v254 = vsel %vm222, %v157, -inf
      %v255 = vsel %vm223, %v158, -inf
      %v256 = vsel %vm224, %v159, -inf
      %v257 = vsel %vm225, %v160, -inf
      %v258 = vsel %vm226, %v161, -inf
      %v259 = vsel %vm227, %v162, -inf
      %v260 = vsel %vm228, %v163, -inf
      %v261 = vsel %vm229, %v164, -inf
      %v262 = vsel %vm230, %v165, -inf
      %v263 = vsel %vm231, %v166, -inf
      %v264 = vsel %vm232, %v167, -inf
      %v265 = vsel %vm233, %v168, -inf
      %v266 = vsel %vm234, %v169, -inf
      %v267 = vsel %vm235, %v170, -inf
      %v268 = vsel %vm236, %v171, -inf
      %v269 = vsel %vm237, %v172, -inf
      %v270 = vsel %vm238, %v173, -inf
      %v271 = vsel %vm239, %v174, -inf
      %v272 = vsel %vm240, %v175, -inf
      %v273 = vsel %vm241, %v176, -inf
      %v274 = vsel %vm242, %v177, -inf
      %v275 = vsel %vm243, %v178, -inf
      %v276 = vsel %vm244, %v179, -inf
      %v277 = vsel %vm245, %v180, -inf
      %v278 = vsel %vm246, %v181, -inf
      %v279 = vsel %vm247, %v182, -inf
      %v280 = vsel %vm248, %v183, -inf
      %v281 = vsel %vm249, %v184, -inf
      %v282 = vsel %vm218, %v153, inf
      %v283 = vsel %vm219, %v154, inf
      %v284 = vsel %vm220, %v155, inf
      %v285 = vsel %vm221, %v156, inf
      %v286 = vsel %vm222, %v157, inf
      %v287 = vsel %vm223, %v158, inf
      %v288 = vsel %vm224, %v159, inf
      %v289 = vsel %vm225, %v160, inf
      %v290 = vsel %vm226, %v161, inf
      %v291 = vsel %vm227, %v162, inf
      %v292 = vsel %vm228, %v163, inf
      %v293 = vsel %vm229, %v164, inf
      %v294 = vsel %vm230, %v165, inf
      %v295 = vsel %vm231, %v166, inf
      %v296 = vsel %vm232, %v167, inf
      %v297 = vsel %vm233, %v168, inf
      %v298 = vsel %vm234, %v169, inf
      %v299 = vsel %vm235, %v170, inf
      %v300 = vsel %vm236, %v171, inf
      %v301 = vsel %vm237, %v172, inf
      %v302 = vsel %vm238, %v173, inf
      %v303 = vsel %vm239, %v174, inf
      %v304 = vsel %vm240, %v175, inf
      %v305 = vsel %vm241, %v176, inf
      %v306 = vsel %vm242, %v177, inf
      %v307 = vsel %vm243, %v178, inf
      %v308 = vsel %vm244, %v179, inf
      %v309 = vsel %vm245, %v180, inf
      %v310 = vsel %vm246, %v181, inf
      %v311 = vsel %vm247, %v182, inf
      %v312 = vsel %vm248, %v183, inf
      %v313 = vsel %vm249, %v184, inf
      %v314 = vld [vmem:[#allocation2] sm:$0xff]
      %v315 = vmax.f32 %v250, %v254
      %v316 = vmax.f32 %v251, %v255
      %v317 = vmax.f32 %v252, %v256
      %v318 = vmax.f32 %v253, %v257
      %v319 = vmax.f32 %v315, %v258
      %v320 = vmax.f32 %v316, %v259
      %v321 = vmax.f32 %v317, %v260
      %v322 = vmax.f32 %v318, %v261
      %v323 = vmax.f32 %v319, %v262
      %v324 = vmax.f32 %v320, %v263
      %v325 = vmax.f32 %v321, %v264
      %v326 = vmax.f32 %v322, %v265
      %v327 = vmax.f32 %v323, %v266
      %v328 = vmax.f32 %v324, %v267
      %v329 = vmax.f32 %v325, %v268
      %v330 = vmax.f32 %v326, %v269
      %v331 = vmax.f32 %v327, %v270
      %v332 = vmax.f32 %v328, %v271
      %v333 = vmax.f32 %v329, %v272
      %v334 = vmax.f32 %v330, %v273
      %v335 = vmax.f32 %v331, %v274
      %v336 = vmax.f32 %v332, %v275
      %v337 = vmax.f32 %v333, %v276
      %v338 = vmax.f32 %v334, %v277
      %v339 = vmax.f32 %v335, %v278
      %v340 = vmax.f32 %v336, %v279
      %v341 = vmax.f32 %v337, %v280
      %v342 = vmax.f32 %v338, %v281
      %v343 = vmax.f32 %v339, %v340
      %v344 = vmax.f32 %v341, %v342
      %v345 = vmax.f32 %v343, %v344
      %v346 = vmax.f32 %v314, %v345
      %347 = vst [vmem:[#allocation2] sm:$0xff] %v346
      %v348 = vld [vmem:[#allocation3] sm:$0xff]
      %v349 = vmin.f32 %v282, %v286
      %v350 = vmin.f32 %v283, %v287
      %v351 = vmin.f32 %v284, %v288
      %v352 = vmin.f32 %v285, %v289
      %v353 = vmin.f32 %v349, %v290
      %v354 = vmin.f32 %v350, %v291
      %v355 = vmin.f32 %v351, %v292
      %v356 = vmin.f32 %v352, %v293
      %v357 = vmin.f32 %v353, %v294
      %v358 = vmin.f32 %v354, %v295
      %v359 = vmin.f32 %v355, %v296
      %v360 = vmin.f32 %v356, %v297
      %v361 = vmin.f32 %v357, %v298
      %v362 = vmin.f32 %v358, %v299
      %v363 = vmin.f32 %v359, %v300
      %v364 = vmin.f32 %v360, %v301
      %v365 = vmin.f32 %v361, %v302
      %v366 = vmin.f32 %v362, %v303
      %v367 = vmin.f32 %v363, %v304
      %v368 = vmin.f32 %v364, %v305
      %v369 = vmin.f32 %v365, %v306
      %v370 = vmin.f32 %v366, %v307
      %v371 = vmin.f32 %v367, %v308
      %v372 = vmin.f32 %v368, %v309
      %v373 = vmin.f32 %v369, %v310
      %v374 = vmin.f32 %v370, %v311
      %v375 = vmin.f32 %v371, %v312
      %v376 = vmin.f32 %v372, %v313
      %v377 = vmin.f32 %v373, %v374
      %v378 = vmin.f32 %v375, %v376
      %v379 = vmin.f32 %v377, %v378
      %v380 = vmin.f32 %v348, %v379
      %381 = vst [vmem:[#allocation3] sm:$0xff] %v380
    $region21: #{tpu_custom_call.1} parent=1 // pred_fallthru
      _
    // Predicated region
    $region22: #{tpu_custom_call.1} parent=1 // pred_check
      %p382 = pneg %p39
    $region23: #{tpu_custom_call.1} parent=1 // pred_check_branch
      %384 = sbr.rel (%p382) target = $region25
    $region24: #{tpu_custom_call.1} parent=1 // pred_region
      %v385 = vld [vmem:[#allocation2] sm:$0xff]
      %386 = vst [vmem:[#allocation7] sm:$0xff] %v385
      %v387 = vld [vmem:[#allocation3] sm:$0xff]
      %388 = vst [vmem:[#allocation8] sm:$0xff] %v387
    $region25: #{tpu_custom_call.1} parent=1 // pred_fallthru
      _
    // Predicated region
    $region26: #{tpu_custom_call.1} parent=1 // pred_check
      _
    $region27: #{tpu_custom_call.1} parent=1 // pred_check_branch
      %390 = sbr.rel (0) target = $region29
    $region28: #{tpu_custom_call.1} parent=1 // pred_region
      %s392 = ssub.s32 128, 128
      %393 = vsyncadd [#allocation6], %s392
      %s395 = sshll.u32 [#allocation7], 4
      %s396 = int_to_ptr.vmem [resolvable:$true] %s395
      %398 = dma.vmem_to_hbm [thread:$0]  %s396, 128, %s1, [#allocation6]
    $region29: #{tpu_custom_call.1} parent=1 // pred_fallthru
      _
    // Predicated region
    $region30: #{tpu_custom_call.1} parent=1 // pred_check
      _
    $region31: #{tpu_custom_call.1} parent=1 // pred_check_branch
      %400 = sbr.rel (0) target = $region33
    $region32: #{tpu_custom_call.1} parent=1 // pred_region
      %s402 = ssub.s32 128, 128
      %403 = vsyncadd [#allocation9], %s402
      %s405 = sshll.u32 [#allocation8], 4
      %s406 = int_to_ptr.vmem [resolvable:$true] %s405
      %408 = dma.vmem_to_hbm [thread:$0]  %s406, 128, %s2, [#allocation9]
    $region33: #{tpu_custom_call.1} parent=1 // pred_fallthru
      _
    // Predicated region
    $region34: #{tpu_custom_call.1} parent=1 // pred_check
      _
    $region35: #{tpu_custom_call.1} parent=1 // pred_check_branch
      %410 = sbr.rel (0) target = $region37
    $region36: #{tpu_custom_call.1} parent=1 // pred_region
      %411 = dma.done [#allocation6], 128
    $region37: #{tpu_custom_call.1} parent=1 // pred_fallthru
      _
    // Predicated region
    $region38: #{tpu_custom_call.1} parent=1 // pred_check
      _
    $region39: #{tpu_custom_call.1} parent=1 // pred_check_branch
      %413 = sbr.rel (0) target = $region41
    $region40: #{tpu_custom_call.1} parent=1 // pred_region
      %414 = dma.done [#allocation9], 128
    $region41: #{tpu_custom_call.1} parent=1 // pred_fallthru
      _
    %415 = vsyncpa [#allocation5], 1
    %416 = vsyncpa [#allocation6], 1
    %417 = vsyncpa [#allocation9], 1

</llo_original>
